<compile_context>
chip_gen: v7x
topology: tpu7x:2x2x1
jax: 0.10.0
libtpu: 0.0.40
codegen_flags: <defaults>
</compile_context>

<pallas_src>
from functools import partial

import jax
import jax.numpy as jnp
from jax.experimental import pallas as pl
from jax.experimental.pallas import tpu as pltpu

_LANE = 128          # vreg lane width
_SUBLANE = 8         # vreg sublane count
_NEG_INF = -1e30     # bias for padded logit lanes -> exp underflows to 0


def _round_up(n, m):
    return ((n + m - 1) // m) * m


def _num_tensorcores():
    """1 TC/chip on v5e/v6e, 2 TC/chip on v7x.  Defaults to 1 if unknown."""
    try:
        kind = jax.devices()[0].device_kind.lower()
        if "v7" in kind:
            return 2
    except Exception:
        pass
    return 1


# ----------------------------------------------------------------------------
# Kernel: fused  relu(x @ W1 + b1) @ W2 + b2  ->  row softmax
# ----------------------------------------------------------------------------
def policy_net_kernel(x_ref, w1_ref, b1_ref, w2_ref, b2_ref, o_ref):
    # l1: bf16 operands on the MXU, f32 accumulation; bias + ReLU on the VPU.
    h = jnp.dot(x_ref[...], w1_ref[...], preferred_element_type=jnp.float32)
    h = jnp.maximum(h + b1_ref[...], 0.0)

    # l2: recast h to bf16 for the MXU, accumulate in f32.
    logits = jnp.dot(h.astype(jnp.bfloat16), w2_ref[...],
                     preferred_element_type=jnp.float32)
    logits = logits + b2_ref[...]              # padded lanes carry -1e30 bias

    # Numerically stable softmax over the lane axis (dim=1).
    m = jnp.max(logits, axis=-1, keepdims=True)        # XLU
    e = jnp.exp(logits - m)                             # EUP; padded lanes -> 0
    denom = jnp.sum(e, axis=-1, keepdims=True)          # XLU
    o_ref[...] = (e / denom).astype(o_ref.dtype)        # exact divide


# ----------------------------------------------------------------------------
# One-time parameter preparation (padding + bf16 casts hoisted out of forward)
# ----------------------------------------------------------------------------
def prepare_params(w1, b1, w2, b2):
    """Pad/cast static parameters once.

    w1: (A, H)  b1: (1, H)   (weights stored (in, out), i.e. torch weight.T)
    w2: (H, A)  b2: (1, A)

    Returns (w1_p bf16 (A, H_pad), b1_p f32 (1, H_pad),
             w2_p bf16 (H_pad, A_pad), b2_p f32 (1, A_pad)).
    """
    A, H = w1.shape
    H_pad = _round_up(H, _LANE)
    A_pad = _round_up(A, _LANE)

    # Contraction dim A stays unpadded for W1; only the hidden/output lanes pad.
    w1_p = jnp.zeros((A, H_pad), jnp.float32).at[:, :H].set(w1).astype(jnp.bfloat16)
    b1_p = jnp.zeros((1, H_pad), jnp.float32).at[:, :H].set(b1)
    w2_p = jnp.zeros((H_pad, A_pad), jnp.float32).at[:H, :A].set(w2).astype(jnp.bfloat16)
    # Padded logit lanes get a large negative bias so they vanish in softmax.
    b2_p = jnp.full((1, A_pad), _NEG_INF, jnp.float32).at[:, :A].set(b2)
    return w1_p, b1_p, w2_p, b2_p


# ----------------------------------------------------------------------------
# Forward (whole path jitted so pad / cast / slice fuse with the kernel)
# ----------------------------------------------------------------------------
@partial(jax.jit, static_argnames=("tile_b",))
def _forward_padded(x, w1_p, b1_p, w2_p, b2_p, tile_b):
    B, A = x.shape
    A_in, H_pad = w1_p.shape
    A_pad = w2_p.shape[1]
    assert A == A_in, "x feature dim must match W1 input dim"

    B_pad = _round_up(B, tile_b)
    # Pad batch rows only; feature dim A stays at its true (unpadded) width.
    x_p = jnp.zeros((B_pad, A), jnp.bfloat16).at[:B].set(x.astype(jnp.bfloat16))

    grid = (B_pad // tile_b,)

    flops = 2 * B_pad * A * H_pad + 2 * B_pad * H_pad * A_pad
    bytes_accessed = (x_p.size * 2 + w1_p.size * 2 + w2_p.size * 2
                      + b1_p.size * 4 + b2_p.size * 4 + B_pad * A_pad * 4)

    out_p = pl.pallas_call(
        policy_net_kernel,
        out_shape=jax.ShapeDtypeStruct((B_pad, A_pad), jnp.float32),
        grid=grid,
        in_specs=[
            # x: tiled over batch rows; last dim == full array dim (no 128 pad).
            pl.BlockSpec((tile_b, A), lambda i: (i, 0)),
            # Weights/biases: index_map (0, 0) -> VMEM-resident across steps.
            pl.BlockSpec((A, H_pad), lambda i: (0, 0)),
            pl.BlockSpec((1, H_pad), lambda i: (0, 0)),
            pl.BlockSpec((H_pad, A_pad), lambda i: (0, 0)),
            pl.BlockSpec((1, A_pad), lambda i: (0, 0)),
        ],
        out_specs=pl.BlockSpec((tile_b, A_pad), lambda i: (i, 0)),
        compiler_params=pltpu.CompilerParams(
            # Batch tiles are independent -> shard across v7x's 2 TensorCores.
            dimension_semantics=("parallel",),
        ),
        cost_estimate=pl.CostEstimate(
            flops=flops,
            transcendentals=B_pad * A_pad,
            bytes_accessed=bytes_accessed,
        ),
    )(x_p, w1_p, b1_p, w2_p, b2_p)

    # Slice fuses inside the jit; padded batch rows / logit lanes are dropped.
    return out_p[:B, :A]


def policy_net_forward(x, w1_p, b1_p, w2_p, b2_p, *, tile_b=None):
    """PolicyNet forward: softmax(relu(x @ w1 + b1) @ w2 + b2, axis=1).

    Expects parameters already prepared by prepare_params().
    """
    B = x.shape[0]
    if tile_b is None:
        # One grid step per TensorCore: grid=1 on v5e/v6e, grid=2 on v7x.
        ntc = _num_tensorcores()
        tile_b = max(_SUBLANE, _round_up(pl.cdiv(B, ntc), _SUBLANE))
    return _forward_padded(x, w1_p, b1_p, w2_p, b2_p, tile_b)


# ----------------------------------------------------------------------------
# Synthetic init matching nn.Linear shapes in PolicyNet.__init__
# ----------------------------------------------------------------------------
def init_params(key, action_size, hidden_dim):
    k1, k2, k3, k4 = jax.random.split(key, 4)
    # PyTorch nn.Linear stores weight as (out, in); we store (in, out).
    bound1 = 1.0 / jnp.sqrt(action_size)
    bound2 = 1.0 / jnp.sqrt(hidden_dim)
    w1 = jax.random.uniform(k1, (action_size, hidden_dim), jnp.float32, -bound1, bound1)
    b1 = jax.random.uniform(k2, (1, hidden_dim), jnp.float32, -bound1, bound1)
    w2 = jax.random.uniform(k3, (hidden_dim, action_size), jnp.float32, -bound2, bound2)
    b2 = jax.random.uniform(k4, (1, action_size), jnp.float32, -bound2, bound2)
    return w1, b1, w2, b2


if __name__ == "__main__":
    # Small module-scale dims; batch of states amortizes launch + weight DMA.
    batch, action_size, hidden_dim = 64, 16, 32

    key = jax.random.PRNGKey(0)
    kx, kp = jax.random.split(key)
    x = jax.random.normal(kx, (batch, action_size), jnp.float32)
    w1, b1, w2, b2 = init_params(kp, action_size, hidden_dim)

    # One-time parameter prep (padding + bf16 casts hoisted out of forward).
    w1_p, b1_p, w2_p, b2_p = prepare_params(w1, b1, w2, b2)

    out = policy_net_forward(x, w1_p, b1_p, w2_p, b2_p)
    jax.block_until_ready(out)

    # Plain-JAX f32 reference; tolerance accounts for bf16 MXU operands.
    h_ref = jnp.maximum(x @ w1 + b1, 0.0)
    ref = jax.nn.softmax(h_ref @ w2 + b2, axis=1)
    assert out.shape == (batch, action_size)
    assert jnp.allclose(out, ref, atol=2e-2, rtol=2e-2), "mismatch vs reference"
    assert jnp.allclose(jnp.sum(out, axis=1), 1.0, atol=1e-4), "softmax rows must sum to 1"

    print("KERNEL_OK")
</pallas_src>

<mosaic_0001>
module attributes {stable_mosaic.version = 11 : i64} {
  func.func @policy_net_kernel(%arg0: i32, %arg1: memref<64x16xbf16, #tpu.memory_space<vmem>>, %arg2: memref<16x128xbf16, #tpu.memory_space<vmem>>, %arg3: memref<1x128xf32, #tpu.memory_space<vmem>>, %arg4: memref<128x128xbf16, #tpu.memory_space<vmem>>, %arg5: memref<1x128xf32, #tpu.memory_space<vmem>>, %arg6: memref<64x128xf32, #tpu.memory_space<vmem>>) attributes {dimension_semantics = [#tpu.dimension_semantics<parallel>], iteration_bounds = array<i64: 1>, scalar_prefetch = 0 : i64, scratch_operands = 0 : i64, tpu.core_type = #tpu.core_type<tc>, window_params = [{transform_indices = @transform_0, window_bounds = array<i64: 64, 16>}, {pipeline_mode = #tpu.pipeline_mode<synchronous>, transform_indices = @transform_1, window_bounds = array<i64: 16, 128>}, {pipeline_mode = #tpu.pipeline_mode<synchronous>, transform_indices = @transform_2, window_bounds = array<i64: 1, 128>}, {pipeline_mode = #tpu.pipeline_mode<synchronous>, transform_indices = @transform_3, window_bounds = array<i64: 128, 128>}, {pipeline_mode = #tpu.pipeline_mode<synchronous>, transform_indices = @transform_4, window_bounds = array<i64: 1, 128>}, {transform_indices = @transform_5, window_bounds = array<i64: 64, 128>}]} {
    %c0 = arith.constant 0 : index
    %c0_0 = arith.constant 0 : index
    %0 = vector.load %arg1[%c0, %c0_0] : memref<64x16xbf16, #tpu.memory_space<vmem>>, vector<64x16xbf16>
    %c0_1 = arith.constant 0 : index
    %c0_2 = arith.constant 0 : index
    %1 = vector.load %arg2[%c0_1, %c0_2] : memref<16x128xbf16, #tpu.memory_space<vmem>>, vector<16x128xbf16>
    %cst = arith.constant dense<0.000000e+00> : vector<64x128xf32>
    %2 = tpu.matmul %0, %1, %cst {dimension_numbers = #tpu.dot_dimension_numbers<[1], [0], [0], [1], [0, 0, 1, 1], [], []>} : vector<64x16xbf16>, vector<16x128xbf16>, vector<64x128xf32> -> vector<64x128xf32>
    %c0_3 = arith.constant 0 : index
    %c0_4 = arith.constant 0 : index
    %3 = vector.load %arg3[%c0_3, %c0_4] : memref<1x128xf32, #tpu.memory_space<vmem>>, vector<1x128xf32>
    %4 = vector.broadcast %3 : vector<1x128xf32> to vector<64x128xf32>
    %5 = arith.addf %2, %4 : vector<64x128xf32>
    %cst_5 = arith.constant 0.000000e+00 : f32
    %6 = vector.broadcast %cst_5 : f32 to vector<64x128xf32>
    %7 = arith.maximumf %5, %6 : vector<64x128xf32>
    %8 = arith.truncf %7 : vector<64x128xf32> to vector<64x128xbf16>
    %c0_6 = arith.constant 0 : index
    %c0_7 = arith.constant 0 : index
    %9 = vector.load %arg4[%c0_6, %c0_7] : memref<128x128xbf16, #tpu.memory_space<vmem>>, vector<128x128xbf16>
    %cst_8 = arith.constant dense<0.000000e+00> : vector<64x128xf32>
    %10 = tpu.matmul %8, %9, %cst_8 {dimension_numbers = #tpu.dot_dimension_numbers<[1], [0], [0], [1], [0, 0, 1, 1], [], []>} : vector<64x128xbf16>, vector<128x128xbf16>, vector<64x128xf32> -> vector<64x128xf32>
    %c0_9 = arith.constant 0 : index
    %c0_10 = arith.constant 0 : index
    %11 = vector.load %arg5[%c0_9, %c0_10] : memref<1x128xf32, #tpu.memory_space<vmem>>, vector<1x128xf32>
    %12 = vector.broadcast %11 : vector<1x128xf32> to vector<64x128xf32>
    %13 = arith.addf %10, %12 : vector<64x128xf32>
    %cst_11 = arith.constant dense<0xFF800000> : vector<64xf32>
    %14 = vector.multi_reduction <maximumf>, %13, %cst_11 [1] : vector<64x128xf32> to vector<64xf32>
    %15 = vector.shape_cast %14 : vector<64xf32> to vector<64x1xf32>
    %16 = vector.broadcast %15 : vector<64x1xf32> to vector<64x128xf32>
    %17 = arith.subf %13, %16 : vector<64x128xf32>
    %18 = math.exp %17 : vector<64x128xf32>
    %cst_12 = arith.constant dense<0.000000e+00> : vector<64xf32>
    %19 = vector.multi_reduction <add>, %18, %cst_12 [1] : vector<64x128xf32> to vector<64xf32>
    %20 = vector.shape_cast %19 : vector<64xf32> to vector<64x1xf32>
    %21 = vector.broadcast %20 : vector<64x1xf32> to vector<64x128xf32>
    %22 = arith.divf %18, %21 : vector<64x128xf32>
    %c0_13 = arith.constant 0 : index
    %c0_14 = arith.constant 0 : index
    %23 = vector.load %arg6[%c0_13, %c0_14] : memref<64x128xf32, #tpu.memory_space<vmem>>, vector<64x128xf32>
    tpu.vector_store %arg6[%c0_13, %c0_14], %22 {strides = array<i32>} : memref<64x128xf32, #tpu.memory_space<vmem>>, vector<64x128xf32>,
    return
  }
  func.func @transform_0(%arg0: i32) -> (i32, i32) {
    %c0_i32 = arith.constant 0 : i32
    %c0_i32_0 = arith.constant 0 : i32
    return %arg0, %c0_i32 : i32, i32
  }
  func.func @transform_1(%arg0: i32) -> (i32, i32) {
    %c0_i32 = arith.constant 0 : i32
    %c0_i32_0 = arith.constant 0 : i32
    %c0_i32_1 = arith.constant 0 : i32
    return %c0_i32, %c0_i32_0 : i32, i32
  }
  func.func @transform_2(%arg0: i32) -> (i32, i32) {
    %c0_i32 = arith.constant 0 : i32
    %c0_i32_0 = arith.constant 0 : i32
    %c0_i32_1 = arith.constant 0 : i32
    return %c0_i32, %c0_i32_0 : i32, i32
  }
  func.func @transform_3(%arg0: i32) -> (i32, i32) {
    %c0_i32 = arith.constant 0 : i32
    %c0_i32_0 = arith.constant 0 : i32
    %c0_i32_1 = arith.constant 0 : i32
    return %c0_i32, %c0_i32_0 : i32, i32
  }
  func.func @transform_4(%arg0: i32) -> (i32, i32) {
    %c0_i32 = arith.constant 0 : i32
    %c0_i32_0 = arith.constant 0 : i32
    %c0_i32_1 = arith.constant 0 : i32
    return %c0_i32, %c0_i32_0 : i32, i32
  }
  func.func @transform_5(%arg0: i32) -> (i32, i32) {
    %c0_i32 = arith.constant 0 : i32
    %c0_i32_0 = arith.constant 0 : i32
    return %arg0, %c0_i32 : i32, i32
  }
}

</mosaic_0001>

<llo_original>
// kernel: _forward_padded.1
$region0: #{_forward_padded.1}
  #allocation0 [shape = 'u32[]', space=smem, size = 0x4, offset = 0x4, fixed_abs, tag = 'smem constant byte address 0x4 - core index']
  #allocation1 [shape = 'u32[144,128]{1,0:T(1,128)}', space=vmem, size = 0x12000, scoped, tag = 'internal scratch']
  %s0 = inlined_call_operand.vmem [shape: bf16[64,16], index: 0, kind: input, shape index: {}]
  %s1 = inlined_call_operand.vmem [shape: bf16[16,128], index: 1, kind: input, shape index: {}]
  %s2 = inlined_call_operand.vmem [shape: f32[1,128], index: 2, kind: input, shape index: {}]
  %s3 = inlined_call_operand.vmem [shape: bf16[128,128], index: 3, kind: input, shape index: {}]
  %s4 = inlined_call_operand.vmem [shape: f32[1,128], index: 4, kind: input, shape index: {}]
  %s5 = inlined_call_operand.vmem [shape: f32[64,128], index: 5, kind: output, shape index: {}]
  %s6 = sld [smem:[#allocation0]]
  $region30: #{_forward_padded.1} parent=0
    _
  %s8 = ssub.s32 1, %s6
  %s9 = scalar_select 0, %s8, %s6
  // Predicated region
  $region2: #{_forward_padded.1} parent=0 // pred_check
    _
  $region3: #{_forward_padded.1} parent=0 // pred_check_branch
    %11 = sbr.rel (0) target = $region5
  $region4: #{_forward_padded.1} parent=0 // pred_region
    _
  $region5: #{_forward_padded.1} parent=0 // pred_fallthru
    _
  // Predicated region
  $region6: #{_forward_padded.1} parent=0 // pred_check
    _
  $region7: #{_forward_padded.1} parent=0 // pred_check_branch
    %13 = sbr.rel (0) target = $region9
  $region8: #{_forward_padded.1} parent=0 // pred_region
    _
  $region9: #{_forward_padded.1} parent=0 // pred_fallthru
    _
  // Predicated region
  $region10: #{_forward_padded.1} parent=0 // pred_check
    _
  $region11: #{_forward_padded.1} parent=0 // pred_check_branch
    %15 = sbr.rel (0) target = $region13
  $region12: #{_forward_padded.1} parent=0 // pred_region
    _
  $region13: #{_forward_padded.1} parent=0 // pred_fallthru
    _
  // Predicated region
  $region14: #{_forward_padded.1} parent=0 // pred_check
    _
  $region15: #{_forward_padded.1} parent=0 // pred_check_branch
    %17 = sbr.rel (0) target = $region17
  $region16: #{_forward_padded.1} parent=0 // pred_region
    _
  $region17: #{_forward_padded.1} parent=0 // pred_fallthru
    _
  // Predicated region
  $region18: #{_forward_padded.1} parent=0 // pred_check
    _
  $region19: #{_forward_padded.1} parent=0 // pred_check_branch
    %19 = sbr.rel (0) target = $region21
  $region20: #{_forward_padded.1} parent=0 // pred_region
    _
  $region21: #{_forward_padded.1} parent=0 // pred_fallthru
    _
  %v21 = vld [vmem:[%s0] sm:$0xf]
  %v22 = vld [vmem:[%s0 + $0x4] sm:$0xf]
  %v23 = vld [vmem:[%s0 + $0x8] sm:$0xf]
  %v24 = vld [vmem:[%s0 + $0xc] sm:$0xf]
  %v25 = vld [vmem:[%s0 + $0x10] sm:$0xf]
  %v26 = vld [vmem:[%s0 + $0x14] sm:$0xf]
  %v27 = vld [vmem:[%s0 + $0x18] sm:$0xf]
  %v28 = vld [vmem:[%s0 + $0x1c] sm:$0xf]
  %v29 = vld [vmem:[%s1] sm:$0xf]
  %v30 = vld [vmem:[%s1 + $0x4] sm:$0xf]
  %v31 = vld [vmem:[%s2] sm:$0x1]
  %v33 = vlaneseq
  %v34 = vshrl.u32 %v33, 7
  %v35 = vsub.s32 0, %v34
  %v36 = vrot.slane %v31, %v35
  %v46 = vunpack.c.l.b16 %v21
  %v47 = vunpack.c.l.b16 %v22
  %v48 = vunpack.c.l.b16 %v23
  %v49 = vunpack.c.l.b16 %v24
  %v50 = vunpack.c.l.b16 %v25
  %v51 = vunpack.c.l.b16 %v26
  %v52 = vunpack.c.l.b16 %v27
  %v53 = vunpack.c.l.b16 %v28
  %v54 = vpack.c.b16 %v47, %v46
  %v55 = vpack.c.b16 %v49, %v48
  %v56 = vpack.c.b16 %v51, %v50
  %v57 = vpack.c.b16 %v53, %v52
  %v60 = vunpack.c.l.b16 %v29
  %v61 = vunpack.c.l.b16 %v30
  %v62 = vpack.c.b16 %v61, %v60
  %vm64 = vcmask 130048
  %v66 = vsel %vm64, %v54, 0
  %v69 = vsel %vm64, %v55, 0
  %v72 = vsel %vm64, %v56, 0
  %v75 = vsel %vm64, %v57, 0
  %77 = vmatprep.subr.bf16.mxu0 0
  %78 = vmatpush1.bf16.msra.mxu0 %v62
  %79 = vmatprep.subr.bf16.mxu0 0
  %80 = vmatpush1.bf16.msra.mxu0 0
  %81 = vmatprep.subr.bf16.mxu0 0
  %82 = vmatpush1.bf16.msra.mxu0 0
  %83 = vmatprep.subr.bf16.mxu0 0
  %84 = vmatpush1.bf16.msra.mxu0 0
  %85 = vmatprep.subr.bf16.mxu0 0
  %86 = vmatpush1.bf16.msra.mxu0 0
  %87 = vmatprep.subr.bf16.mxu0 0
  %88 = vmatpush1.bf16.msra.mxu0 0
  %89 = vmatprep.subr.bf16.mxu0 0
  %90 = vmatpush1.bf16.msra.mxu0 0
  %91 = vmatprep.subr.bf16.mxu0 0
  %92 = vmatpush1.bf16.msra.mxu0 0
  %93 = vmatprep.subr.bf16.mxu0 0
  %94 = vmatpush1.bf16.msra.mxu0 0
  %95 = vmatprep.subr.bf16.mxu0 0
  %96 = vmatpush1.bf16.msra.mxu0 0
  %97 = vmatprep.subr.bf16.mxu0 0
  %98 = vmatpush1.bf16.msra.mxu0 0
  %99 = vmatprep.subr.bf16.mxu0 0
  %100 = vmatpush1.bf16.msra.mxu0 0
  %101 = vmatprep.subr.bf16.mxu0 0
  %102 = vmatpush1.bf16.msra.mxu0 0
  %103 = vmatprep.subr.bf16.mxu0 0
  %104 = vmatpush1.bf16.msra.mxu0 0
  %105 = vmatprep.subr.bf16.mxu0 0
  %106 = vmatpush1.bf16.msra.mxu0 0
  %107 = vmatprep.subr.bf16.mxu0 0
  %108 = vmatpush1.bf16.msra.mxu0 0
  %109 = vmatprep.mubr.bf16.mxu0 0
  %110 = vmatmul.mubr.bf16.gmra.mrb[0].mxu0 %v66
  %v111 = vpop.f32.mrb[0].mxu0
  %v112 = vadd.f32 %v36, %v111
  %v113 = vpop.f32.mrb[0].mxu0
  %v114 = vpop.f32.mrb[0].mxu0
  %v115 = vadd.f32 %v36, %v114
  %v116 = vpop.f32.mrb[0].mxu0
  %117 = vmatprep.mubr.bf16.mxu0 0
  %118 = vmatmul.mubr.bf16.gmra.mrb[0].mxu0 %v69
  %v119 = vpop.f32.mrb[0].mxu0
  %v120 = vadd.f32 %v36, %v119
  %v121 = vpop.f32.mrb[0].mxu0
  %v122 = vpop.f32.mrb[0].mxu0
  %v123 = vadd.f32 %v36, %v122
  %v124 = vpop.f32.mrb[0].mxu0
  %125 = vmatprep.mubr.bf16.mxu0 0
  %126 = vmatmul.mubr.bf16.gmra.mrb[0].mxu0 %v72
  %v127 = vpop.f32.mrb[0].mxu0
  %v128 = vadd.f32 %v36, %v127
  %v129 = vpop.f32.mrb[0].mxu0
  %v130 = vpop.f32.mrb[0].mxu0
  %v131 = vadd.f32 %v36, %v130
  %v132 = vpop.f32.mrb[0].mxu0
  %133 = vmatprep.mubr.bf16.mxu0 0
  %134 = vmatmul.mubr.bf16.gmra.mrb[0].mxu0 %v75
  %v135 = vpop.f32.mrb[0].mxu0
  %v136 = vadd.f32 %v36, %v135
  %v137 = vpop.f32.mrb[0].mxu0
  %v138 = vpop.f32.mrb[0].mxu0
  %v139 = vadd.f32 %v36, %v138
  %v140 = vpop.f32.mrb[0].mxu0
  %141 = vdwg.mxu0
  %v142 = vmax.f32 %v112, 0.0
  %v143 = vmax.f32 %v115, 0.0
  %v144 = vmax.f32 %v120, 0.0
  %v145 = vmax.f32 %v123, 0.0
  %v146 = vmax.f32 %v128, 0.0
  %v147 = vmax.f32 %v131, 0.0
  %v148 = vmax.f32 %v136, 0.0
  %v149 = vmax.f32 %v139, 0.0
  %v150 = vpack.c.bf16 %v143, %v142
  %v151 = vpack.c.bf16 %v145, %v144
  %v152 = vpack.c.bf16 %v147, %v146
  %v153 = vpack.c.bf16 %v149, %v148
  %v154 = vld [vmem:[%s3] sm:$0xf]
  %v155 = vld [vmem:[%s3 + $0x4] sm:$0xf]
  %v156 = vld [vmem:[%s3 + $0x8] sm:$0xf]
  %v157 = vld [vmem:[%s3 + $0xc] sm:$0xf]
  %v158 = vld [vmem:[%s3 + $0x10] sm:$0xf]
  %v159 = vld [vmem:[%s3 + $0x14] sm:$0xf]
  %v160 = vld [vmem:[%s3 + $0x18] sm:$0xf]
  %v161 = vld [vmem:[%s3 + $0x1c] sm:$0xf]
  %v162 = vld [vmem:[%s3 + $0x20] sm:$0xf]
  %v163 = vld [vmem:[%s3 + $0x24] sm:$0xf]
  %v164 = vld [vmem:[%s3 + $0x28] sm:$0xf]
  %v165 = vld [vmem:[%s3 + $0x2c] sm:$0xf]
  %v166 = vld [vmem:[%s3 + $0x30] sm:$0xf]
  %v167 = vld [vmem:[%s3 + $0x34] sm:$0xf]
  %v168 = vld [vmem:[%s3 + $0x38] sm:$0xf]
  %v169 = vld [vmem:[%s3 + $0x3c] sm:$0xf]
  %v170 = vld [vmem:[%s4] sm:$0x1]
  %v172 = vlaneseq
  %v173 = vshrl.u32 %v172, 7
  %v174 = vsub.s32 0, %v173
  %v175 = vrot.slane %v170, %v174
  %v193 = vunpack.c.l.b16 %v154
  %v194 = vunpack.c.l.b16 %v155
  %v195 = vunpack.c.l.b16 %v156
  %v196 = vunpack.c.l.b16 %v157
  %v197 = vunpack.c.l.b16 %v158
  %v198 = vunpack.c.l.b16 %v159
  %v199 = vunpack.c.l.b16 %v160
  %v200 = vunpack.c.l.b16 %v161
  %v201 = vunpack.c.l.b16 %v162
  %v202 = vunpack.c.l.b16 %v163
  %v203 = vunpack.c.l.b16 %v164
  %v204 = vunpack.c.l.b16 %v165
  %v205 = vunpack.c.l.b16 %v166
  %v206 = vunpack.c.l.b16 %v167
  %v207 = vunpack.c.l.b16 %v168
  %v208 = vunpack.c.l.b16 %v169
  %v209 = vpack.c.b16 %v194, %v193
  %v210 = vpack.c.b16 %v196, %v195
  %v211 = vpack.c.b16 %v198, %v197
  %v212 = vpack.c.b16 %v200, %v199
  %v213 = vpack.c.b16 %v202, %v201
  %v214 = vpack.c.b16 %v204, %v203
  %v215 = vpack.c.b16 %v206, %v205
  %v216 = vpack.c.b16 %v208, %v207
  %225 = vmatprep.subr.bf16.mxu0 0
  %226 = vmatpush1.bf16.msra.mxu0 %v209
  %227 = vmatprep.subr.bf16.mxu0 0
  %228 = vmatpush1.bf16.msra.mxu0 %v210
  %229 = vmatprep.subr.bf16.mxu0 0
  %230 = vmatpush1.bf16.msra.mxu0 %v211
  %231 = vmatprep.subr.bf16.mxu0 0
  %232 = vmatpush1.bf16.msra.mxu0 %v212
  %233 = vmatprep.subr.bf16.mxu0 0
  %234 = vmatpush1.bf16.msra.mxu0 %v213
  %235 = vmatprep.subr.bf16.mxu0 0
  %236 = vmatpush1.bf16.msra.mxu0 %v214
  %237 = vmatprep.subr.bf16.mxu0 0
  %238 = vmatpush1.bf16.msra.mxu0 %v215
  %239 = vmatprep.subr.bf16.mxu0 0
  %240 = vmatpush1.bf16.msra.mxu0 %v216
  %241 = vmatprep.subr.bf16.mxu0 0
  %242 = vmatpush1.bf16.msra.mxu0 0
  %243 = vmatprep.subr.bf16.mxu0 0
  %244 = vmatpush1.bf16.msra.mxu0 0
  %245 = vmatprep.subr.bf16.mxu0 0
  %246 = vmatpush1.bf16.msra.mxu0 0
  %247 = vmatprep.subr.bf16.mxu0 0
  %248 = vmatpush1.bf16.msra.mxu0 0
  %249 = vmatprep.subr.bf16.mxu0 0
  %250 = vmatpush1.bf16.msra.mxu0 0
  %251 = vmatprep.subr.bf16.mxu0 0
  %252 = vmatpush1.bf16.msra.mxu0 0
  %253 = vmatprep.subr.bf16.mxu0 0
  %254 = vmatpush1.bf16.msra.mxu0 0
  %255 = vmatprep.subr.bf16.mxu0 0
  %256 = vmatpush1.bf16.msra.mxu0 0
  %257 = vmatprep.mubr.bf16.mxu0 0
  %258 = vmatmul.mubr.bf16.gmra.mrb[0].mxu0 %v150
  %v259 = vpop.f32.mrb[0].mxu0
  %v260 = vadd.f32 %v175, %v259
  %v261 = vpop.f32.mrb[0].mxu0
  %v262 = vpop.f32.mrb[0].mxu0
  %v263 = vadd.f32 %v175, %v262
  %v264 = vpop.f32.mrb[0].mxu0
  %265 = vmatprep.mubr.bf16.mxu0 0
  %266 = vmatmul.mubr.bf16.gmra.mrb[0].mxu0 %v151
  %v267 = vpop.f32.mrb[0].mxu0
  %v268 = vadd.f32 %v175, %v267
  %v269 = vpop.f32.mrb[0].mxu0
  %v270 = vpop.f32.mrb[0].mxu0
  %v271 = vadd.f32 %v175, %v270
  %v272 = vpop.f32.mrb[0].mxu0
  %273 = vmatprep.mubr.bf16.mxu0 0
  %274 = vmatmul.mubr.bf16.gmra.mrb[0].mxu0 %v152
  %v275 = vpop.f32.mrb[0].mxu0
  %v276 = vadd.f32 %v175, %v275
  %v277 = vpop.f32.mrb[0].mxu0
  %v278 = vpop.f32.mrb[0].mxu0
  %v279 = vadd.f32 %v175, %v278
  %v280 = vpop.f32.mrb[0].mxu0
  %281 = vmatprep.mubr.bf16.mxu0 0
  %282 = vmatmul.mubr.bf16.gmra.mrb[0].mxu0 %v153
  %v283 = vpop.f32.mrb[0].mxu0
  %v284 = vadd.f32 %v175, %v283
  %v285 = vpop.f32.mrb[0].mxu0
  %v286 = vpop.f32.mrb[0].mxu0
  %v287 = vadd.f32 %v175, %v286
  %v288 = vpop.f32.mrb[0].mxu0
  %289 = vdwg.mxu0
  %290 = vmax.xlane.f32.xlu0 %v260
  %v291 = vpop.xlane.xlu0 %290
  %292 = vmax.xlane.f32.xlu0 %v263
  %v293 = vpop.xlane.xlu0 %292
  %294 = vmax.xlane.f32.xlu0 %v268
  %v295 = vpop.xlane.xlu0 %294
  %296 = vmax.xlane.f32.xlu0 %v271
  %v297 = vpop.xlane.xlu0 %296
  %298 = vmax.xlane.f32.xlu0 %v276
  %v299 = vpop.xlane.xlu0 %298
  %300 = vmax.xlane.f32.xlu0 %v279
  %v301 = vpop.xlane.xlu0 %300
  %302 = vmax.xlane.f32.xlu0 %v284
  %v303 = vpop.xlane.xlu0 %302
  %304 = vmax.xlane.f32.xlu0 %v287
  %v305 = vpop.xlane.xlu0 %304
  %v306 = vsub.f32 %v260, %v291
  %v307 = vsub.f32 %v263, %v293
  %v308 = vsub.f32 %v268, %v295
  %v309 = vsub.f32 %v271, %v297
  %v310 = vsub.f32 %v276, %v299
  %v311 = vsub.f32 %v279, %v301
  %v312 = vsub.f32 %v284, %v303
  %v313 = vsub.f32 %v287, %v305
  %v314 = vmul.f32 %v306, 1.442695
  %v315 = vpow.pop %v314
  %v316 = vmul.f32 %v307, 1.442695
  %v317 = vpow.pop %v316
  %v318 = vmul.f32 %v308, 1.442695
  %v319 = vpow.pop %v318
  %v320 = vmul.f32 %v309, 1.442695
  %v321 = vpow.pop %v320
  %v322 = vmul.f32 %v310, 1.442695
  %v323 = vpow.pop %v322
  %v324 = vmul.f32 %v311, 1.442695
  %v325 = vpow.pop %v324
  %v326 = vmul.f32 %v312, 1.442695
  %v327 = vpow.pop %v326
  %v328 = vmul.f32 %v313, 1.442695
  %v329 = vpow.pop %v328
  %330 = vadd.xlane.f32.xlu0 %v315
  %v331 = vpop.xlane.xlu0 %330
  %332 = vadd.xlane.f32.xlu0 %v317
  %v333 = vpop.xlane.xlu0 %332
  %334 = vadd.xlane.f32.xlu0 %v319
  %v335 = vpop.xlane.xlu0 %334
  %336 = vadd.xlane.f32.xlu0 %v321
  %v337 = vpop.xlane.xlu0 %336
  %338 = vadd.xlane.f32.xlu0 %v323
  %v339 = vpop.xlane.xlu0 %338
  %340 = vadd.xlane.f32.xlu0 %v325
  %v341 = vpop.xlane.xlu0 %340
  %342 = vadd.xlane.f32.xlu0 %v327
  %v343 = vpop.xlane.xlu0 %342
  %344 = vadd.xlane.f32.xlu0 %v329
  %v345 = vpop.xlane.xlu0 %344
  %v346 = vrcp.pop %v331
  %v347 = vmul.f32 %v315, %v346
  %v348 = vrcp.pop %v333
  %v349 = vmul.f32 %v317, %v348
  %v350 = vrcp.pop %v335
  %v351 = vmul.f32 %v319, %v350
  %v352 = vrcp.pop %v337
  %v353 = vmul.f32 %v321, %v352
  %v354 = vrcp.pop %v339
  %v355 = vmul.f32 %v323, %v354
  %v356 = vrcp.pop %v341
  %v357 = vmul.f32 %v325, %v356
  %v358 = vrcp.pop %v343
  %v359 = vmul.f32 %v327, %v358
  %v360 = vrcp.pop %v345
  %v361 = vmul.f32 %v329, %v360
  %362 = vst [vmem:[%s5] sm:$0xff] %v347
  %363 = vst [vmem:[%s5 + $0x8] sm:$0xff] %v349
  %364 = vst [vmem:[%s5 + $0x10] sm:$0xff] %v351
  %365 = vst [vmem:[%s5 + $0x18] sm:$0xff] %v353
  %366 = vst [vmem:[%s5 + $0x20] sm:$0xff] %v355
  %367 = vst [vmem:[%s5 + $0x28] sm:$0xff] %v357
  %368 = vst [vmem:[%s5 + $0x30] sm:$0xff] %v359
  %369 = vst [vmem:[%s5 + $0x38] sm:$0xff] %v361
  // Predicated region
  $region22: #{_forward_padded.1} parent=0 // pred_check
    _
  $region23: #{_forward_padded.1} parent=0 // pred_check_branch
    %371 = sbr.rel (0) target = $region25
  $region24: #{_forward_padded.1} parent=0 // pred_region
    _
  $region25: #{_forward_padded.1} parent=0 // pred_fallthru
    _
  // Predicated region
  $region26: #{_forward_padded.1} parent=0 // pred_check
    _
  $region27: #{_forward_padded.1} parent=0 // pred_check_branch
    %373 = sbr.rel (0) target = $region29
  $region28: #{_forward_padded.1} parent=0 // pred_region
    _
  $region29: #{_forward_padded.1} parent=0 // pred_fallthru
    _

</llo_original>
